<compile_context>
chip_gen: v5e
topology: v5e:2x2
jax: 0.10.0
libtpu: 0.0.40
codegen_flags: <defaults>
</compile_context>

<pallas_src>
import functools

import jax
import jax.numpy as jnp
from jax import lax
from jax.experimental import pallas as pl
from jax.experimental.pallas import tpu as pltpu  # noqa: F401  (TPU backend)


def _elu(x):
    # F.elu with alpha=1: x if x > 0 else exp(x) - 1
    return jnp.where(x > 0, x, jnp.exp(x) - 1.0)


def _attention_head(xh, a_src, a_dst, mask_bias):
    """One GAT attention head on already-transformed features.

    xh: [N, C] transformed node features, a_src/a_dst: [1, C],
    mask_bias: [N, N] additive bias laid out [target, source]
               (0 on edges/self-loops, -1e30 elsewhere).
    """
    # Destination term: VPU multiply + reduce -> column [N, 1].
    dst_col = jnp.sum(xh * a_dst, axis=-1, keepdims=True)
    # Source term as a row [1, N]: one tiny dot yields lane-major orientation
    # directly (avoids an explicit sublane->lane transpose of a column vector).
    src_row = lax.dot_general(a_src, xh, (((1,), (1,)), ((), ())),
                              preferred_element_type=jnp.float32)
    scores = dst_col + src_row                               # e[i, j], [N, N]
    scores = jnp.where(scores > 0, scores, 0.2 * scores)     # LeakyReLU(0.2)
    scores = scores + mask_bias                              # mask non-edges
    m = jnp.max(scores, axis=-1, keepdims=True)
    p = jnp.exp(scores - m)          # masked entries underflow to exactly 0
    denom = jnp.sum(p, axis=-1, keepdims=True)
    probs = p * pl.reciprocal(denom, approx=True)            # row softmax
    return jnp.dot(probs, xh, preferred_element_type=jnp.float32)   # [N, C]


def _gat_fused_kernel(x_ref, maskb_ref,
                      w1_ref, as1_ref, ad1_ref, b1_ref,
                      w2_ref, as2_ref, ad2_ref, b2_ref,
                      w3_ref, b3_ref,
                      o_ref, *, heads, hidden):
    n = x_ref.shape[0]
    c1 = hidden
    mask_bias = maskb_ref[...].astype(jnp.float32)           # [N, N]

    # ---- conv1: linear transform for all heads at once -------------------
    xh1 = jnp.dot(x_ref[...], w1_ref[...],
                  preferred_element_type=jnp.float32)         # [N, H*C1]
    as1 = as1_ref[...]                                        # [H, C1]
    ad1 = ad1_ref[...]                                        # [H, C1]
    b1 = b1_ref[...]                                          # [1, H*C1]
    w2 = w2_ref[...]                                          # [H*C1, C2]
    c2 = w2.shape[1]

    # Per-head attention + bias + ELU, folded straight into conv2's linear
    # transform (matmul distributes over the concat axis), so the concatenated
    # [N, H*C1] activation is never materialized.
    xh2 = jnp.zeros((n, c2), jnp.float32)
    for h in range(heads):                                    # static unroll
        sl = slice(h * c1, (h + 1) * c1)
        out_h = _attention_head(xh1[:, sl], as1[h:h + 1, :], ad1[h:h + 1, :],
                                mask_bias)                    # [N, C1]
        h1_h = _elu(out_h + b1[:, sl])                        # [N, C1]
        xh2 = xh2 + jnp.dot(h1_h, w2[sl, :],
                            preferred_element_type=jnp.float32)

    # ---- conv2: single head, concat=False (mean over 1 head == identity) --
    out2 = _attention_head(xh2, as2_ref[...], ad2_ref[...], mask_bias)
    h2 = _elu(out2 + b2_ref[...])                             # [N, C2]

    # ---- final Linear + Sigmoid -------------------------------------------
    y = jnp.dot(h2, w3_ref[...],
                preferred_element_type=jnp.float32) + b3_ref[...]
    o_ref[...] = 1.0 / (1.0 + jnp.exp(-y))


def _full_spec(shape):
    return pl.BlockSpec(shape, lambda i: (0,) * len(shape))


@functools.partial(jax.jit, static_argnames=("heads", "hidden"))
def gat_forward(params, x, mask_bias, heads, hidden):
    n = x.shape[0]
    out_ch = params["W3"].shape[1]
    operands = (x, mask_bias,
                params["W1"], params["att_src1"], params["att_dst1"], params["bias1"],
                params["W2"], params["att_src2"], params["att_dst2"], params["bias2"],
                params["W3"], params["b3"])
    return pl.pallas_call(
        functools.partial(_gat_fused_kernel, heads=heads, hidden=hidden),
        out_shape=jax.ShapeDtypeStruct((n, out_ch), jnp.float32),
        grid=(1,),
        in_specs=[_full_spec(op.shape) for op in operands],
        out_specs=_full_spec((n, out_ch)),
    )(*operands)


# ---------------------------------------------------------------------------
# Parameters (stored pre-transposed so the forward pass does no layout work)
# ---------------------------------------------------------------------------

def glorot(key, shape):
    std = (2.0 / (shape[0] + shape[1])) ** 0.5
    return std * jax.random.normal(key, shape, jnp.float32)


def init_params(key, in_ch, hidden, heads, out_ch):
    hid4 = hidden // 4
    ks = jax.random.split(key, 8)
    return {
        # conv1: in_ch -> hidden per head, `heads` heads, concat
        "W1": glorot(ks[0], (in_ch, heads * hidden)),          # [in, H*C1]
        "att_src1": glorot(ks[1], (heads, hidden)),
        "att_dst1": glorot(ks[2], (heads, hidden)),
        "bias1": jnp.zeros((1, heads * hidden), jnp.float32),
        # conv2: heads*hidden -> hidden//4, 1 head, no concat
        "W2": glorot(ks[3], (heads * hidden, hid4)),           # [H*C1, C2]
        "att_src2": glorot(ks[4], (1, hid4)),
        "att_dst2": glorot(ks[5], (1, hid4)),
        "bias2": jnp.zeros((1, hid4), jnp.float32),
        # lin: hidden//4 -> out_ch
        "W3": glorot(ks[6], (hid4, out_ch)),                   # [C2, out]
        "b3": jnp.zeros((1, out_ch), jnp.float32),
    }


if __name__ == "__main__":
    key = jax.random.PRNGKey(0)
    k_x, k_p, k_e = jax.random.split(key, 3)

    N = 16           # number of graph nodes
    in_ch = 8
    hidden = 8
    heads = 2
    out_ch = 4

    x = jax.random.normal(k_x, (N, in_ch), jnp.float32)

    # Deterministic ring graph (both directions).
    idx = jnp.arange(N)
    src = jnp.concatenate([idx, idx])
    dst = jnp.concatenate([(idx + 1) % N, (idx - 1) % N])
    edge_index = jnp.stack([src, dst])                                 # [2, E]
    edge_attr = jax.random.normal(k_e, (2 * N, 3), jnp.float32)        # unused

    # Dense adjacency with self-loops (adj[target, source] = 1), encoded as an
    # additive bf16 bias: 0 on edges/self-loops, -1e30 on non-edges.
    adj = jnp.zeros((N, N), jnp.float32)
    adj = adj.at[edge_index[1], edge_index[0]].set(1.0)
    adj = adj.at[jnp.arange(N), jnp.arange(N)].set(1.0)
    mask_bias = jnp.where(adj > 0, 0.0, -1e30).astype(jnp.bfloat16)

    params = init_params(k_p, in_ch, hidden, heads, out_ch)

    out = gat_forward(params, x, mask_bias, heads=heads, hidden=hidden)
    out = jax.block_until_ready(out)

    assert out.shape == (N, out_ch)
    assert bool(jnp.all(jnp.isfinite(out)))
    assert bool(jnp.all((out >= 0.0) & (out <= 1.0)))   # sigmoid output range
    print("KERNEL_OK")
</pallas_src>

<mosaic_0001>
module attributes {stable_mosaic.version = 11 : i64} {
  func.func @_gat_fused_kernel(%arg0: i32, %arg1: memref<16x8xf32, #tpu.memory_space<vmem>>, %arg2: memref<16x16xbf16, #tpu.memory_space<vmem>>, %arg3: memref<8x16xf32, #tpu.memory_space<vmem>>, %arg4: memref<2x8xf32, #tpu.memory_space<vmem>>, %arg5: memref<2x8xf32, #tpu.memory_space<vmem>>, %arg6: memref<1x16xf32, #tpu.memory_space<vmem>>, %arg7: memref<16x2xf32, #tpu.memory_space<vmem>>, %arg8: memref<1x2xf32, #tpu.memory_space<vmem>>, %arg9: memref<1x2xf32, #tpu.memory_space<vmem>>, %arg10: memref<1x2xf32, #tpu.memory_space<vmem>>, %arg11: memref<2x4xf32, #tpu.memory_space<vmem>>, %arg12: memref<1x4xf32, #tpu.memory_space<vmem>>, %arg13: memref<16x4xf32, #tpu.memory_space<vmem>>) attributes {dimension_semantics = [#tpu.dimension_semantics<arbitrary>], iteration_bounds = array<i64: 1>, scalar_prefetch = 0 : i64, scratch_operands = 0 : i64, tpu.core_type = #tpu.core_type<tc>, window_params = [{pipeline_mode = #tpu.pipeline_mode<synchronous>, transform_indices = @transform_0, window_bounds = array<i64: 16, 8>}, {pipeline_mode = #tpu.pipeline_mode<synchronous>, transform_indices = @transform_1, window_bounds = array<i64: 16, 16>}, {pipeline_mode = #tpu.pipeline_mode<synchronous>, transform_indices = @transform_2, window_bounds = array<i64: 8, 16>}, {pipeline_mode = #tpu.pipeline_mode<synchronous>, transform_indices = @transform_3, window_bounds = array<i64: 2, 8>}, {pipeline_mode = #tpu.pipeline_mode<synchronous>, transform_indices = @transform_4, window_bounds = array<i64: 2, 8>}, {pipeline_mode = #tpu.pipeline_mode<synchronous>, transform_indices = @transform_5, window_bounds = array<i64: 1, 16>}, {pipeline_mode = #tpu.pipeline_mode<synchronous>, transform_indices = @transform_6, window_bounds = array<i64: 16, 2>}, {pipeline_mode = #tpu.pipeline_mode<synchronous>, transform_indices = @transform_7, window_bounds = array<i64: 1, 2>}, {pipeline_mode = #tpu.pipeline_mode<synchronous>, transform_indices = @transform_8, window_bounds = array<i64: 1, 2>}, {pipeline_mode = #tpu.pipeline_mode<synchronous>, transform_indices = @transform_9, window_bounds = array<i64: 1, 2>}, {pipeline_mode = #tpu.pipeline_mode<synchronous>, transform_indices = @transform_10, window_bounds = array<i64: 2, 4>}, {pipeline_mode = #tpu.pipeline_mode<synchronous>, transform_indices = @transform_11, window_bounds = array<i64: 1, 4>}, {pipeline_mode = #tpu.pipeline_mode<synchronous>, transform_indices = @transform_12, window_bounds = array<i64: 16, 4>}]} {
    %c0 = arith.constant 0 : index
    %c0_0 = arith.constant 0 : index
    %0 = vector.load %arg2[%c0, %c0_0] : memref<16x16xbf16, #tpu.memory_space<vmem>>, vector<16x16xbf16>
    %1 = arith.extf %0 : vector<16x16xbf16> to vector<16x16xf32>
    %c0_1 = arith.constant 0 : index
    %c0_2 = arith.constant 0 : index
    %2 = vector.load %arg1[%c0_1, %c0_2] : memref<16x8xf32, #tpu.memory_space<vmem>>, vector<16x8xf32>
    %c0_3 = arith.constant 0 : index
    %c0_4 = arith.constant 0 : index
    %3 = vector.load %arg3[%c0_3, %c0_4] : memref<8x16xf32, #tpu.memory_space<vmem>>, vector<8x16xf32>
    %cst = arith.constant dense<0.000000e+00> : vector<16x16xf32>
    %4 = tpu.matmul %2, %3, %cst {dimension_numbers = #tpu.dot_dimension_numbers<[1], [0], [0], [1], [0, 0, 1, 1], [], []>} : vector<16x8xf32>, vector<8x16xf32>, vector<16x16xf32> -> vector<16x16xf32>
    %c0_5 = arith.constant 0 : index
    %c0_6 = arith.constant 0 : index
    %5 = vector.load %arg4[%c0_5, %c0_6] : memref<2x8xf32, #tpu.memory_space<vmem>>, vector<2x8xf32>
    %c0_7 = arith.constant 0 : index
    %c0_8 = arith.constant 0 : index
    %6 = vector.load %arg5[%c0_7, %c0_8] : memref<2x8xf32, #tpu.memory_space<vmem>>, vector<2x8xf32>
    %c0_9 = arith.constant 0 : index
    %c0_10 = arith.constant 0 : index
    %7 = vector.load %arg6[%c0_9, %c0_10] : memref<1x16xf32, #tpu.memory_space<vmem>>, vector<1x16xf32>
    %c0_11 = arith.constant 0 : index
    %c0_12 = arith.constant 0 : index
    %8 = vector.load %arg7[%c0_11, %c0_12] : memref<16x2xf32, #tpu.memory_space<vmem>>, vector<16x2xf32>
    %cst_13 = arith.constant 0.000000e+00 : f32
    %9 = vector.broadcast %cst_13 : f32 to vector<16x2xf32>
    %10 = vector.extract_strided_slice %4 {offsets = [0, 0], sizes = [16, 8], strides = [1, 1]} : vector<16x16xf32> to vector<16x8xf32>
    %11 = vector.extract_strided_slice %5 {offsets = [0, 0], sizes = [1, 8], strides = [1, 1]} : vector<2x8xf32> to vector<1x8xf32>
    %12 = vector.extract_strided_slice %6 {offsets = [0, 0], sizes = [1, 8], strides = [1, 1]} : vector<2x8xf32> to vector<1x8xf32>
    %13 = vector.broadcast %12 : vector<1x8xf32> to vector<16x8xf32>
    %14 = arith.mulf %10, %13 : vector<16x8xf32>
    %cst_14 = arith.constant dense<0.000000e+00> : vector<16xf32>
    %15 = vector.multi_reduction <add>, %14, %cst_14 [1] : vector<16x8xf32> to vector<16xf32>
    %16 = vector.shape_cast %15 : vector<16xf32> to vector<16x1xf32>
    %cst_15 = arith.constant dense<0.000000e+00> : vector<1x16xf32>
    %17 = tpu.matmul %11, %10, %cst_15 {dimension_numbers = #tpu.dot_dimension_numbers<[1], [1], [0], [0], [0, 0, 1, 0], [], []>} : vector<1x8xf32>, vector<16x8xf32>, vector<1x16xf32> -> vector<1x16xf32>
    %18 = vector.broadcast %16 : vector<16x1xf32> to vector<16x16xf32>
    %19 = vector.broadcast %17 : vector<1x16xf32> to vector<16x16xf32>
    %20 = arith.addf %18, %19 : vector<16x16xf32>
    %cst_16 = arith.constant 0.000000e+00 : f32
    %21 = vector.broadcast %cst_16 : f32 to vector<16x16xf32>
    %22 = arith.cmpf ogt, %20, %21 : vector<16x16xf32>
    %cst_17 = arith.constant 2.000000e-01 : f32
    %23 = vector.broadcast %cst_17 : f32 to vector<16x16xf32>
    %24 = arith.mulf %23, %20 : vector<16x16xf32>
    %25 = arith.select %22, %20, %24 : vector<16x16xi1>, vector<16x16xf32>
    %26 = arith.addf %25, %1 : vector<16x16xf32>
    %cst_18 = arith.constant dense<0xFF800000> : vector<16xf32>
    %27 = vector.multi_reduction <maximumf>, %26, %cst_18 [1] : vector<16x16xf32> to vector<16xf32>
    %28 = vector.shape_cast %27 : vector<16xf32> to vector<16x1xf32>
    %29 = vector.broadcast %28 : vector<16x1xf32> to vector<16x16xf32>
    %30 = arith.subf %26, %29 : vector<16x16xf32>
    %31 = math.exp %30 : vector<16x16xf32>
    %cst_19 = arith.constant dense<0.000000e+00> : vector<16xf32>
    %32 = vector.multi_reduction <add>, %31, %cst_19 [1] : vector<16x16xf32> to vector<16xf32>
    %33 = vector.shape_cast %32 : vector<16xf32> to vector<16x1xf32>
    %34 = tpu.reciprocal %33 {approx = true} : vector<16x1xf32> -> vector<16x1xf32>
    %35 = vector.broadcast %34 : vector<16x1xf32> to vector<16x16xf32>
    %36 = arith.mulf %31, %35 : vector<16x16xf32>
    %cst_20 = arith.constant dense<0.000000e+00> : vector<16x8xf32>
    %37 = tpu.matmul %36, %10, %cst_20 {dimension_numbers = #tpu.dot_dimension_numbers<[1], [0], [0], [1], [0, 0, 1, 1], [], []>} : vector<16x16xf32>, vector<16x8xf32>, vector<16x8xf32> -> vector<16x8xf32>
    %38 = vector.extract_strided_slice %7 {offsets = [0, 0], sizes = [1, 8], strides = [1, 1]} : vector<1x16xf32> to vector<1x8xf32>
    %39 = vector.broadcast %38 : vector<1x8xf32> to vector<16x8xf32>
    %40 = arith.addf %37, %39 : vector<16x8xf32>
    %cst_21 = arith.constant 0.000000e+00 : f32
    %41 = vector.broadcast %cst_21 : f32 to vector<16x8xf32>
    %42 = arith.cmpf ogt, %40, %41 : vector<16x8xf32>
    %43 = math.exp %40 : vector<16x8xf32>
    %cst_22 = arith.constant 1.000000e+00 : f32
    %44 = vector.broadcast %cst_22 : f32 to vector<16x8xf32>
    %45 = arith.subf %43, %44 : vector<16x8xf32>
    %46 = arith.select %42, %40, %45 : vector<16x8xi1>, vector<16x8xf32>
    %47 = vector.extract_strided_slice %8 {offsets = [0, 0], sizes = [8, 2], strides = [1, 1]} : vector<16x2xf32> to vector<8x2xf32>
    %cst_23 = arith.constant dense<0.000000e+00> : vector<16x2xf32>
    %48 = tpu.matmul %46, %47, %cst_23 {dimension_numbers = #tpu.dot_dimension_numbers<[1], [0], [0], [1], [0, 0, 1, 1], [], []>} : vector<16x8xf32>, vector<8x2xf32>, vector<16x2xf32> -> vector<16x2xf32>
    %49 = arith.addf %9, %48 : vector<16x2xf32>
    %50 = vector.extract_strided_slice %4 {offsets = [0, 8], sizes = [16, 8], strides = [1, 1]} : vector<16x16xf32> to vector<16x8xf32>
    %51 = vector.extract_strided_slice %5 {offsets = [1, 0], sizes = [1, 8], strides = [1, 1]} : vector<2x8xf32> to vector<1x8xf32>
    %52 = vector.extract_strided_slice %6 {offsets = [1, 0], sizes = [1, 8], strides = [1, 1]} : vector<2x8xf32> to vector<1x8xf32>
    %53 = vector.broadcast %52 : vector<1x8xf32> to vector<16x8xf32>
    %54 = arith.mulf %50, %53 : vector<16x8xf32>
    %cst_24 = arith.constant dense<0.000000e+00> : vector<16xf32>
    %55 = vector.multi_reduction <add>, %54, %cst_24 [1] : vector<16x8xf32> to vector<16xf32>
    %56 = vector.shape_cast %55 : vector<16xf32> to vector<16x1xf32>
    %cst_25 = arith.constant dense<0.000000e+00> : vector<1x16xf32>
    %57 = tpu.matmul %51, %50, %cst_25 {dimension_numbers = #tpu.dot_dimension_numbers<[1], [1], [0], [0], [0, 0, 1, 0], [], []>} : vector<1x8xf32>, vector<16x8xf32>, vector<1x16xf32> -> vector<1x16xf32>
    %58 = vector.broadcast %56 : vector<16x1xf32> to vector<16x16xf32>
    %59 = vector.broadcast %57 : vector<1x16xf32> to vector<16x16xf32>
    %60 = arith.addf %58, %59 : vector<16x16xf32>
    %cst_26 = arith.constant 0.000000e+00 : f32
    %61 = vector.broadcast %cst_26 : f32 to vector<16x16xf32>
    %62 = arith.cmpf ogt, %60, %61 : vector<16x16xf32>
    %cst_27 = arith.constant 2.000000e-01 : f32
    %63 = vector.broadcast %cst_27 : f32 to vector<16x16xf32>
    %64 = arith.mulf %63, %60 : vector<16x16xf32>
    %65 = arith.select %62, %60, %64 : vector<16x16xi1>, vector<16x16xf32>
    %66 = arith.addf %65, %1 : vector<16x16xf32>
    %cst_28 = arith.constant dense<0xFF800000> : vector<16xf32>
    %67 = vector.multi_reduction <maximumf>, %66, %cst_28 [1] : vector<16x16xf32> to vector<16xf32>
    %68 = vector.shape_cast %67 : vector<16xf32> to vector<16x1xf32>
    %69 = vector.broadcast %68 : vector<16x1xf32> to vector<16x16xf32>
    %70 = arith.subf %66, %69 : vector<16x16xf32>
    %71 = math.exp %70 : vector<16x16xf32>
    %cst_29 = arith.constant dense<0.000000e+00> : vector<16xf32>
    %72 = vector.multi_reduction <add>, %71, %cst_29 [1] : vector<16x16xf32> to vector<16xf32>
    %73 = vector.shape_cast %72 : vector<16xf32> to vector<16x1xf32>
    %74 = tpu.reciprocal %73 {approx = true} : vector<16x1xf32> -> vector<16x1xf32>
    %75 = vector.broadcast %74 : vector<16x1xf32> to vector<16x16xf32>
    %76 = arith.mulf %71, %75 : vector<16x16xf32>
    %cst_30 = arith.constant dense<0.000000e+00> : vector<16x8xf32>
    %77 = tpu.matmul %76, %50, %cst_30 {dimension_numbers = #tpu.dot_dimension_numbers<[1], [0], [0], [1], [0, 0, 1, 1], [], []>} : vector<16x16xf32>, vector<16x8xf32>, vector<16x8xf32> -> vector<16x8xf32>
    %78 = vector.extract_strided_slice %7 {offsets = [0, 8], sizes = [1, 8], strides = [1, 1]} : vector<1x16xf32> to vector<1x8xf32>
    %79 = vector.broadcast %78 : vector<1x8xf32> to vector<16x8xf32>
    %80 = arith.addf %77, %79 : vector<16x8xf32>
    %cst_31 = arith.constant 0.000000e+00 : f32
    %81 = vector.broadcast %cst_31 : f32 to vector<16x8xf32>
    %82 = arith.cmpf ogt, %80, %81 : vector<16x8xf32>
    %83 = math.exp %80 : vector<16x8xf32>
    %cst_32 = arith.constant 1.000000e+00 : f32
    %84 = vector.broadcast %cst_32 : f32 to vector<16x8xf32>
    %85 = arith.subf %83, %84 : vector<16x8xf32>
    %86 = arith.select %82, %80, %85 : vector<16x8xi1>, vector<16x8xf32>
    %87 = vector.extract_strided_slice %8 {offsets = [8, 0], sizes = [8, 2], strides = [1, 1]} : vector<16x2xf32> to vector<8x2xf32>
    %cst_33 = arith.constant dense<0.000000e+00> : vector<16x2xf32>
    %88 = tpu.matmul %86, %87, %cst_33 {dimension_numbers = #tpu.dot_dimension_numbers<[1], [0], [0], [1], [0, 0, 1, 1], [], []>} : vector<16x8xf32>, vector<8x2xf32>, vector<16x2xf32> -> vector<16x2xf32>
    %89 = arith.addf %49, %88 : vector<16x2xf32>
    %c0_34 = arith.constant 0 : index
    %c0_35 = arith.constant 0 : index
    %90 = vector.load %arg8[%c0_34, %c0_35] : memref<1x2xf32, #tpu.memory_space<vmem>>, vector<1x2xf32>
    %c0_36 = arith.constant 0 : index
    %c0_37 = arith.constant 0 : index
    %91 = vector.load %arg9[%c0_36, %c0_37] : memref<1x2xf32, #tpu.memory_space<vmem>>, vector<1x2xf32>
    %92 = vector.broadcast %91 : vector<1x2xf32> to vector<16x2xf32>
    %93 = arith.mulf %89, %92 : vector<16x2xf32>
    %cst_38 = arith.constant dense<0.000000e+00> : vector<16xf32>
    %94 = vector.multi_reduction <add>, %93, %cst_38 [1] : vector<16x2xf32> to vector<16xf32>
    %95 = vector.shape_cast %94 : vector<16xf32> to vector<16x1xf32>
    %cst_39 = arith.constant dense<0.000000e+00> : vector<1x16xf32>
    %96 = tpu.matmul %90, %89, %cst_39 {dimension_numbers = #tpu.dot_dimension_numbers<[1], [1], [0], [0], [0, 0, 1, 0], [], []>} : vector<1x2xf32>, vector<16x2xf32>, vector<1x16xf32> -> vector<1x16xf32>
    %97 = vector.broadcast %95 : vector<16x1xf32> to vector<16x16xf32>
    %98 = vector.broadcast %96 : vector<1x16xf32> to vector<16x16xf32>
    %99 = arith.addf %97, %98 : vector<16x16xf32>
    %cst_40 = arith.constant 0.000000e+00 : f32
    %100 = vector.broadcast %cst_40 : f32 to vector<16x16xf32>
    %101 = arith.cmpf ogt, %99, %100 : vector<16x16xf32>
    %cst_41 = arith.constant 2.000000e-01 : f32
    %102 = vector.broadcast %cst_41 : f32 to vector<16x16xf32>
    %103 = arith.mulf %102, %99 : vector<16x16xf32>
    %104 = arith.select %101, %99, %103 : vector<16x16xi1>, vector<16x16xf32>
    %105 = arith.addf %104, %1 : vector<16x16xf32>
    %cst_42 = arith.constant dense<0xFF800000> : vector<16xf32>
    %106 = vector.multi_reduction <maximumf>, %105, %cst_42 [1] : vector<16x16xf32> to vector<16xf32>
    %107 = vector.shape_cast %106 : vector<16xf32> to vector<16x1xf32>
    %108 = vector.broadcast %107 : vector<16x1xf32> to vector<16x16xf32>
    %109 = arith.subf %105, %108 : vector<16x16xf32>
    %110 = math.exp %109 : vector<16x16xf32>
    %cst_43 = arith.constant dense<0.000000e+00> : vector<16xf32>
    %111 = vector.multi_reduction <add>, %110, %cst_43 [1] : vector<16x16xf32> to vector<16xf32>
    %112 = vector.shape_cast %111 : vector<16xf32> to vector<16x1xf32>
    %113 = tpu.reciprocal %112 {approx = true} : vector<16x1xf32> -> vector<16x1xf32>
    %114 = vector.broadcast %113 : vector<16x1xf32> to vector<16x16xf32>
    %115 = arith.mulf %110, %114 : vector<16x16xf32>
    %cst_44 = arith.constant dense<0.000000e+00> : vector<16x2xf32>
    %116 = tpu.matmul %115, %89, %cst_44 {dimension_numbers = #tpu.dot_dimension_numbers<[1], [0], [0], [1], [0, 0, 1, 1], [], []>} : vector<16x16xf32>, vector<16x2xf32>, vector<16x2xf32> -> vector<16x2xf32>
    %c0_45 = arith.constant 0 : index
    %c0_46 = arith.constant 0 : index
    %117 = vector.load %arg10[%c0_45, %c0_46] : memref<1x2xf32, #tpu.memory_space<vmem>>, vector<1x2xf32>
    %118 = vector.broadcast %117 : vector<1x2xf32> to vector<16x2xf32>
    %119 = arith.addf %116, %118 : vector<16x2xf32>
    %cst_47 = arith.constant 0.000000e+00 : f32
    %120 = vector.broadcast %cst_47 : f32 to vector<16x2xf32>
    %121 = arith.cmpf ogt, %119, %120 : vector<16x2xf32>
    %122 = math.exp %119 : vector<16x2xf32>
    %cst_48 = arith.constant 1.000000e+00 : f32
    %123 = vector.broadcast %cst_48 : f32 to vector<16x2xf32>
    %124 = arith.subf %122, %123 : vector<16x2xf32>
    %125 = arith.select %121, %119, %124 : vector<16x2xi1>, vector<16x2xf32>
    %c0_49 = arith.constant 0 : index
    %c0_50 = arith.constant 0 : index
    %126 = vector.load %arg11[%c0_49, %c0_50] : memref<2x4xf32, #tpu.memory_space<vmem>>, vector<2x4xf32>
    %cst_51 = arith.constant dense<0.000000e+00> : vector<16x4xf32>
    %127 = tpu.matmul %125, %126, %cst_51 {dimension_numbers = #tpu.dot_dimension_numbers<[1], [0], [0], [1], [0, 0, 1, 1], [], []>} : vector<16x2xf32>, vector<2x4xf32>, vector<16x4xf32> -> vector<16x4xf32>
    %c0_52 = arith.constant 0 : index
    %c0_53 = arith.constant 0 : index
    %128 = vector.load %arg12[%c0_52, %c0_53] : memref<1x4xf32, #tpu.memory_space<vmem>>, vector<1x4xf32>
    %129 = vector.broadcast %128 : vector<1x4xf32> to vector<16x4xf32>
    %130 = arith.addf %127, %129 : vector<16x4xf32>
    %cst_54 = arith.constant 0.000000e+00 : f32
    %131 = vector.broadcast %cst_54 : f32 to vector<16x4xf32>
    %132 = arith.subf %131, %130 : vector<16x4xf32>
    %133 = math.exp %132 : vector<16x4xf32>
    %cst_55 = arith.constant 1.000000e+00 : f32
    %134 = vector.broadcast %cst_55 : f32 to vector<16x4xf32>
    %135 = arith.addf %134, %133 : vector<16x4xf32>
    %cst_56 = arith.constant 1.000000e+00 : f32
    %136 = vector.broadcast %cst_56 : f32 to vector<16x4xf32>
    %137 = arith.divf %136, %135 : vector<16x4xf32>
    %c0_57 = arith.constant 0 : index
    %c0_58 = arith.constant 0 : index
    %138 = vector.load %arg13[%c0_57, %c0_58] : memref<16x4xf32, #tpu.memory_space<vmem>>, vector<16x4xf32>
    tpu.vector_store %arg13[%c0_57, %c0_58], %137 {strides = array<i32>} : memref<16x4xf32, #tpu.memory_space<vmem>>, vector<16x4xf32>,
    return
  }
  func.func @transform_0(%arg0: i32) -> (i32, i32) {
    %c0_i32 = arith.constant 0 : i32
    %c0_i32_0 = arith.constant 0 : i32
    %c0_i32_1 = arith.constant 0 : i32
    return %c0_i32, %c0_i32_0 : i32, i32
  }
  func.func @transform_1(%arg0: i32) -> (i32, i32) {
    %c0_i32 = arith.constant 0 : i32
    %c0_i32_0 = arith.constant 0 : i32
    %c0_i32_1 = arith.constant 0 : i32
    return %c0_i32, %c0_i32_0 : i32, i32
  }
  func.func @transform_2(%arg0: i32) -> (i32, i32) {
    %c0_i32 = arith.constant 0 : i32
    %c0_i32_0 = arith.constant 0 : i32
    %c0_i32_1 = arith.constant 0 : i32
    return %c0_i32, %c0_i32_0 : i32, i32
  }
  func.func @transform_3(%arg0: i32) -> (i32, i32) {
    %c0_i32 = arith.constant 0 : i32
    %c0_i32_0 = arith.constant 0 : i32
    %c0_i32_1 = arith.constant 0 : i32
    return %c0_i32, %c0_i32_0 : i32, i32
  }
  func.func @transform_4(%arg0: i32) -> (i32, i32) {
    %c0_i32 = arith.constant 0 : i32
    %c0_i32_0 = arith.constant 0 : i32
    %c0_i32_1 = arith.constant 0 : i32
    return %c0_i32, %c0_i32_0 : i32, i32
  }
  func.func @transform_5(%arg0: i32) -> (i32, i32) {
    %c0_i32 = arith.constant 0 : i32
    %c0_i32_0 = arith.constant 0 : i32
    %c0_i32_1 = arith.constant 0 : i32
    return %c0_i32, %c0_i32_0 : i32, i32
  }
  func.func @transform_6(%arg0: i32) -> (i32, i32) {
    %c0_i32 = arith.constant 0 : i32
    %c0_i32_0 = arith.constant 0 : i32
    %c0_i32_1 = arith.constant 0 : i32
    return %c0_i32, %c0_i32_0 : i32, i32
  }
  func.func @transform_7(%arg0: i32) -> (i32, i32) {
    %c0_i32 = arith.constant 0 : i32
    %c0_i32_0 = arith.constant 0 : i32
    %c0_i32_1 = arith.constant 0 : i32
    return %c0_i32, %c0_i32_0 : i32, i32
  }
  func.func @transform_8(%arg0: i32) -> (i32, i32) {
    %c0_i32 = arith.constant 0 : i32
    %c0_i32_0 = arith.constant 0 : i32
    %c0_i32_1 = arith.constant 0 : i32
    return %c0_i32, %c0_i32_0 : i32, i32
  }
  func.func @transform_9(%arg0: i32) -> (i32, i32) {
    %c0_i32 = arith.constant 0 : i32
    %c0_i32_0 = arith.constant 0 : i32
    %c0_i32_1 = arith.constant 0 : i32
    return %c0_i32, %c0_i32_0 : i32, i32
  }
  func.func @transform_10(%arg0: i32) -> (i32, i32) {
    %c0_i32 = arith.constant 0 : i32
    %c0_i32_0 = arith.constant 0 : i32
    %c0_i32_1 = arith.constant 0 : i32
    return %c0_i32, %c0_i32_0 : i32, i32
  }
  func.func @transform_11(%arg0: i32) -> (i32, i32) {
    %c0_i32 = arith.constant 0 : i32
    %c0_i32_0 = arith.constant 0 : i32
    %c0_i32_1 = arith.constant 0 : i32
    return %c0_i32, %c0_i32_0 : i32, i32
  }
  func.func @transform_12(%arg0: i32) -> (i32, i32) {
    %c0_i32 = arith.constant 0 : i32
    %c0_i32_0 = arith.constant 0 : i32
    %c0_i32_1 = arith.constant 0 : i32
    return %c0_i32, %c0_i32_0 : i32, i32
  }
}

</mosaic_0001>

<llo_original>
// kernel: gat_forward.1
$region0: #{gat_forward.1}
  #allocation0 [shape = 'u32[]', space=smem, size = 0x4, offset = 0x4, fixed_abs, tag = 'smem constant byte address 0x4 - core index']
  #allocation1 [shape = 'u32[72,128]{1,0:T(1,128)}', space=vmem, size = 0x9000, scoped, tag = 'internal scratch']
  %s0 = inlined_call_operand.vmem [shape: f32[16,8], index: 0, kind: input, shape index: {}]
  %s1 = inlined_call_operand.vmem [shape: bf16[16,16], index: 1, kind: input, shape index: {}]
  %s2 = inlined_call_operand.vmem [shape: f32[8,16], index: 2, kind: input, shape index: {}]
  %s3 = inlined_call_operand.vmem [shape: f32[2,8], index: 3, kind: input, shape index: {}]
  %s4 = inlined_call_operand.vmem [shape: f32[2,8], index: 4, kind: input, shape index: {}]
  %s5 = inlined_call_operand.vmem [shape: f32[1,16], index: 5, kind: input, shape index: {}]
  %s6 = inlined_call_operand.vmem [shape: f32[16,2], index: 6, kind: input, shape index: {}]
  %s7 = inlined_call_operand.vmem [shape: f32[1,2], index: 7, kind: input, shape index: {}]
  %s8 = inlined_call_operand.vmem [shape: f32[1,2], index: 8, kind: input, shape index: {}]
  %s9 = inlined_call_operand.vmem [shape: f32[1,2], index: 9, kind: input, shape index: {}]
  %s10 = inlined_call_operand.vmem [shape: f32[2,4], index: 10, kind: input, shape index: {}]
  %s11 = inlined_call_operand.vmem [shape: f32[1,4], index: 11, kind: input, shape index: {}]
  %s12 = inlined_call_operand.vmem [shape: f32[16,4], index: 12, kind: output, shape index: {}]
  %s13 = sld [smem:[#allocation0]]
  $region58: #{gat_forward.1} parent=0
    _
  %s15 = ssub.s32 1, %s13
  %s16 = scalar_select 0, %s15, %s13
  // Predicated region
  $region2: #{gat_forward.1} parent=0 // pred_check
    _
  $region3: #{gat_forward.1} parent=0 // pred_check_branch
    %18 = sbr.rel (0) target = $region5
  $region4: #{gat_forward.1} parent=0 // pred_region
    _
  $region5: #{gat_forward.1} parent=0 // pred_fallthru
    _
  // Predicated region
  $region6: #{gat_forward.1} parent=0 // pred_check
    _
  $region7: #{gat_forward.1} parent=0 // pred_check_branch
    %20 = sbr.rel (0) target = $region9
  $region8: #{gat_forward.1} parent=0 // pred_region
    _
  $region9: #{gat_forward.1} parent=0 // pred_fallthru
    _
  // Predicated region
  $region10: #{gat_forward.1} parent=0 // pred_check
    _
  $region11: #{gat_forward.1} parent=0 // pred_check_branch
    %22 = sbr.rel (0) target = $region13
  $region12: #{gat_forward.1} parent=0 // pred_region
    _
  $region13: #{gat_forward.1} parent=0 // pred_fallthru
    _
  // Predicated region
  $region14: #{gat_forward.1} parent=0 // pred_check
    _
  $region15: #{gat_forward.1} parent=0 // pred_check_branch
    %24 = sbr.rel (0) target = $region17
  $region16: #{gat_forward.1} parent=0 // pred_region
    _
  $region17: #{gat_forward.1} parent=0 // pred_fallthru
    _
  // Predicated region
  $region18: #{gat_forward.1} parent=0 // pred_check
    _
  $region19: #{gat_forward.1} parent=0 // pred_check_branch
    %26 = sbr.rel (0) target = $region21
  $region20: #{gat_forward.1} parent=0 // pred_region
    _
  $region21: #{gat_forward.1} parent=0 // pred_fallthru
    _
  // Predicated region
  $region22: #{gat_forward.1} parent=0 // pred_check
    _
  $region23: #{gat_forward.1} parent=0 // pred_check_branch
    %28 = sbr.rel (0) target = $region25
  $region24: #{gat_forward.1} parent=0 // pred_region
    _
  $region25: #{gat_forward.1} parent=0 // pred_fallthru
    _
  // Predicated region
  $region26: #{gat_forward.1} parent=0 // pred_check
    _
  $region27: #{gat_forward.1} parent=0 // pred_check_branch
    %30 = sbr.rel (0) target = $region29
  $region28: #{gat_forward.1} parent=0 // pred_region
    _
  $region29: #{gat_forward.1} parent=0 // pred_fallthru
    _
  // Predicated region
  $region30: #{gat_forward.1} parent=0 // pred_check
    _
  $region31: #{gat_forward.1} parent=0 // pred_check_branch
    %32 = sbr.rel (0) target = $region33
  $region32: #{gat_forward.1} parent=0 // pred_region
    _
  $region33: #{gat_forward.1} parent=0 // pred_fallthru
    _
  // Predicated region
  $region34: #{gat_forward.1} parent=0 // pred_check
    _
  $region35: #{gat_forward.1} parent=0 // pred_check_branch
    %34 = sbr.rel (0) target = $region37
  $region36: #{gat_forward.1} parent=0 // pred_region
    _
  $region37: #{gat_forward.1} parent=0 // pred_fallthru
    _
  // Predicated region
  $region38: #{gat_forward.1} parent=0 // pred_check
    _
  $region39: #{gat_forward.1} parent=0 // pred_check_branch
    %36 = sbr.rel (0) target = $region41
  $region40: #{gat_forward.1} parent=0 // pred_region
    _
  $region41: #{gat_forward.1} parent=0 // pred_fallthru
    _
  // Predicated region
  $region42: #{gat_forward.1} parent=0 // pred_check
    _
  $region43: #{gat_forward.1} parent=0 // pred_check_branch
    %38 = sbr.rel (0) target = $region45
  $region44: #{gat_forward.1} parent=0 // pred_region
    _
  $region45: #{gat_forward.1} parent=0 // pred_fallthru
    _
  // Predicated region
  $region46: #{gat_forward.1} parent=0 // pred_check
    _
  $region47: #{gat_forward.1} parent=0 // pred_check_branch
    %40 = sbr.rel (0) target = $region49
  $region48: #{gat_forward.1} parent=0 // pred_region
    _
  $region49: #{gat_forward.1} parent=0 // pred_fallthru
    _
  %v41 = vld [vmem:[%s1] sm:$0xf]
  %v42 = vld [vmem:[%s1 + $0x4] sm:$0xf]
  %v43 = vunpack.c.l.bf16 %v41
  %v44 = vunpack.c.l.bf16 %v42
  %v45 = vld [vmem:[%s0] sm:$0xff]
  %v46 = vld [vmem:[%s0 + $0x8] sm:$0xff]
  %v47 = vld [vmem:[%s2] sm:$0xff]
  %vm48 = vcmask 64512
  %v50 = vsel %vm48, %v45, 0
  %v53 = vsel %vm48, %v46, 0
  %55 = vmatpush.msra.mxu0 0.0
  %56 = vmatpush.msra.mxu0 0.0
  %57 = vmatpush.msra.mxu0 0.0
  %58 = vmatpush.msra.mxu0 0.0
  %59 = vmatpush.msra.mxu0 0.0
  %60 = vmatpush.msra.mxu0 0.0
  %61 = vmatpush.msra.mxu0 0.0
  %62 = vmatpush.msra.mxu0 0.0
  %63 = vmatpush.msra.mxu0 0.0
  %64 = vmatpush.msra.mxu0 0.0
  %65 = vmatpush.msra.mxu0 0.0
  %66 = vmatpush.msra.mxu0 0.0
  %67 = vmatpush.msra.mxu0 0.0
  %68 = vmatpush.msra.mxu0 0.0
  %69 = vmatpush.msra.mxu0 0.0
  %70 = vmatpush.msra.mxu0 %v47
  %71 = vmatmul.f32.gmra.mxu0 %v50
  %v72 = vpop.f32.mrf.mxu0
  %v73 = vadd.f32 0.0, %v72
  %74 = vmatmul.f32.gmra.mxu0 %v53
  %v75 = vpop.f32.mrf.mxu0
  %v76 = vadd.f32 0.0, %v75
  %77 = vdwg.mxu0
  %v78 = vld [vmem:[%s3] sm:$0x3]
  %v79 = vld [vmem:[%s4] sm:$0x3]
  %v80 = vld [vmem:[%s5] sm:$0x1]
  %v81 = vld [vmem:[%s6] sm:$0xff]
  %v82 = vld [vmem:[%s6 + $0x8] sm:$0xff]
  %v83 = vperm.slane %v79, 0
  %v84 = vmul.f32 %v73, %v83
  %v85 = vmul.f32 %v76, %v83
  %v86 = vsel %vm48, %v84, 0.0
  %87 = vadd.xlane.f32.xlu0 %v86
  %v88 = vpop.xlane.xlu0 %87
  %v89 = vsel %vm48, %v85, 0.0
  %90 = vadd.xlane.f32.xlu0 %v89
  %v91 = vpop.xlane.xlu0 %90
  %v93 = vsel %vm48, %v78, 0
  %v96 = vsel %vm48, %v73, 0
  %v99 = vsel %vm48, %v76, 0
  %101 = vmatpush.xpose.msra.mxu0 0.0
  %102 = vmatpush.xpose.msra.mxu0 0.0
  %103 = vmatpush.xpose.msra.mxu0 0.0
  %104 = vmatpush.xpose.msra.mxu0 0.0
  %105 = vmatpush.xpose.msra.mxu0 0.0
  %106 = vmatpush.xpose.msra.mxu0 0.0
  %107 = vmatpush.xpose.msra.mxu0 0.0
  %108 = vmatpush.xpose.msra.mxu0 0.0
  %109 = vmatpush.xpose.msra.mxu0 0.0
  %110 = vmatpush.xpose.msra.mxu0 0.0
  %111 = vmatpush.xpose.msra.mxu0 0.0
  %112 = vmatpush.xpose.msra.mxu0 0.0
  %113 = vmatpush.xpose.msra.mxu0 0.0
  %114 = vmatpush.xpose.msra.mxu0 0.0
  %115 = vmatpush.xpose.msra.mxu0 %v99
  %116 = vmatpush.xpose.msra.mxu0 %v96
  %117 = vmatmul.f32.gmra.mxu0 %v93
  %v118 = vpop.f32.mrf.mxu0
  %v119 = vadd.f32 0.0, %v118
  %120 = vdwg.mxu0
  %v121 = vperm.slane %v119, 0
  %v122 = vadd.f32 %v88, %v121
  %v123 = vadd.f32 %v91, %v121
  %vm124 = vcmp.gt.f32.partialorder %v122, 0.0
  %vm125 = vcmp.gt.f32.partialorder %v123, 0.0
  %v126 = vmul.f32 %v122, 0.2
  %v127 = vmul.f32 %v123, 0.2
  %v128 = vsel %vm124, %v122, %v126
  %v129 = vsel %vm125, %v123, %v127
  %v130 = vadd.f32 %v128, %v43
  %v131 = vadd.f32 %v129, %v44
  %vm132 = vcmask 130048
  %v133 = vsel %vm132, %v130, -inf
  %134 = vmax.xlane.f32.xlu0 %v133
  %v135 = vpop.xlane.xlu0 %134
  %v136 = vsel %vm132, %v131, -inf
  %137 = vmax.xlane.f32.xlu0 %v136
  %v138 = vpop.xlane.xlu0 %137
  %v139 = vsub.f32 %v130, %v135
  %v140 = vsub.f32 %v131, %v138
  %v141 = vmul.f32 %v139, 1.442695
  %v142 = vpow.pop %v141
  %v143 = vmul.f32 %v140, 1.442695
  %v144 = vpow.pop %v143
  %v145 = vsel %vm132, %v142, 0.0
  %146 = vadd.xlane.f32.xlu0 %v145
  %v147 = vpop.xlane.xlu0 %146
  %v148 = vsel %vm132, %v144, 0.0
  %149 = vadd.xlane.f32.xlu0 %v148
  %v150 = vpop.xlane.xlu0 %149
  %v151 = vrcp.pop %v147
  %v152 = vrcp.pop %v150
  %v153 = vmul.f32 %v142, %v151
  %v154 = vmul.f32 %v144, %v152
  %v156 = vperm.slane %v80, 0
  %v159 = vsel %vm132, %v153, 0
  %v162 = vsel %vm132, %v154, 0
  %164 = vmatpush.msra.mxu0 0.0
  %165 = vmatpush.msra.mxu0 0.0
  %166 = vmatpush.msra.mxu0 0.0
  %167 = vmatpush.msra.mxu0 0.0
  %168 = vmatpush.msra.mxu0 0.0
  %169 = vmatpush.msra.mxu0 0.0
  %170 = vmatpush.msra.mxu0 0.0
  %171 = vmatpush.msra.mxu0 0.0
  %172 = vmatpush.msra.mxu0 0.0
  %173 = vmatpush.msra.mxu0 0.0
  %174 = vmatpush.msra.mxu0 0.0
  %175 = vmatpush.msra.mxu0 0.0
  %176 = vmatpush.msra.mxu0 0.0
  %177 = vmatpush.msra.mxu0 0.0
  %178 = vmatpush.msra.mxu0 %v76
  %179 = vmatpush.msra.mxu0 %v73
  %180 = vmatmul.f32.gmra.mxu0 %v159
  %v181 = vpop.f32.mrf.mxu0
  %v182 = vadd.f32 %v156, %v181
  %183 = vmatmul.f32.gmra.mxu0 %v162
  %v184 = vpop.f32.mrf.mxu0
  %v185 = vadd.f32 %v156, %v184
  %186 = vdwg.mxu0
  %vm187 = vcmp.gt.f32.partialorder %v182, 0.0
  %vm188 = vcmp.gt.f32.partialorder %v185, 0.0
  %v189 = vmul.f32 %v182, 1.442695
  %v190 = vpow.pop %v189
  %v191 = vmul.f32 %v185, 1.442695
  %v192 = vpow.pop %v191
  %v193 = vsub.f32 %v190, 1.0
  %v194 = vsub.f32 %v192, 1.0
  %v195 = vsel %vm187, %v182, %v193
  %v196 = vsel %vm188, %v185, %v194
  %v197 = vperm.slane %v79, 1
  %199 = vrot.lane.b32.xlu0 %v197, 8
  %v200 = vpop.permute.xlu0 %199
  %v202 = vmul.f32 %v73, %v200
  %v203 = vmul.f32 %v76, %v200
  %206 = vrot.lane.b32.xlu0 %v202, 120
  %v207 = vpop.permute.xlu0 %206
  %208 = vrot.lane.b32.xlu0 %v203, 120
  %v209 = vpop.permute.xlu0 %208
  %v212 = vsel %vm48, %v207, 0.0
  %213 = vadd.xlane.f32.xlu0 %v212
  %v214 = vpop.xlane.xlu0 %213
  %v215 = vsel %vm48, %v209, 0.0
  %216 = vadd.xlane.f32.xlu0 %v215
  %v217 = vpop.xlane.xlu0 %216
  %v218 = vrot.slane %v78, 1
  %219 = vrot.lane.b32.xlu0 %v73, 120
  %v220 = vpop.permute.xlu0 %219
  %221 = vrot.lane.b32.xlu0 %v76, 120
  %v222 = vpop.permute.xlu0 %221
  %v223 = vsel %vm48, %v218, 0
  %v225 = vsel %vm48, %v220, 0
  %v227 = vsel %vm48, %v222, 0
  %229 = vmatpush.xpose.msra.mxu0 0.0
  %230 = vmatpush.xpose.msra.mxu0 0.0
  %231 = vmatpush.xpose.msra.mxu0 0.0
  %232 = vmatpush.xpose.msra.mxu0 0.0
  %233 = vmatpush.xpose.msra.mxu0 0.0
  %234 = vmatpush.xpose.msra.mxu0 0.0
  %235 = vmatpush.xpose.msra.mxu0 0.0
  %236 = vmatpush.xpose.msra.mxu0 0.0
  %237 = vmatpush.xpose.msra.mxu0 0.0
  %238 = vmatpush.xpose.msra.mxu0 0.0
  %239 = vmatpush.xpose.msra.mxu0 0.0
  %240 = vmatpush.xpose.msra.mxu0 0.0
  %241 = vmatpush.xpose.msra.mxu0 0.0
  %242 = vmatpush.xpose.msra.mxu0 0.0
  %243 = vmatpush.xpose.msra.mxu0 %v227
  %244 = vmatpush.xpose.msra.mxu0 %v225
  %245 = vmatmul.f32.gmra.mxu0 %v223
  %v246 = vpop.f32.mrf.mxu0
  %v247 = vadd.f32 0.0, %v246
  %248 = vdwg.mxu0
  %v249 = vperm.slane %v247, 0
  %v250 = vadd.f32 %v214, %v249
  %v251 = vadd.f32 %v217, %v249
  %vm252 = vcmp.gt.f32.partialorder %v250, 0.0
  %vm253 = vcmp.gt.f32.partialorder %v251, 0.0
  %v254 = vmul.f32 %v250, 0.2
  %v255 = vmul.f32 %v251, 0.2
  %v256 = vsel %vm252, %v250, %v254
  %v257 = vsel %vm253, %v251, %v255
  %v258 = vadd.f32 %v256, %v43
  %v259 = vadd.f32 %v257, %v44
  %v260 = vsel %vm132, %v258, -inf
  %261 = vmax.xlane.f32.xlu0 %v260
  %v262 = vpop.xlane.xlu0 %261
  %v263 = vsel %vm132, %v259, -inf
  %264 = vmax.xlane.f32.xlu0 %v263
  %v265 = vpop.xlane.xlu0 %264
  %v266 = vsub.f32 %v258, %v262
  %v267 = vsub.f32 %v259, %v265
  %v268 = vmul.f32 %v266, 1.442695
  %v269 = vpow.pop %v268
  %v270 = vmul.f32 %v267, 1.442695
  %v271 = vpow.pop %v270
  %v272 = vsel %vm132, %v269, 0.0
  %273 = vadd.xlane.f32.xlu0 %v272
  %v274 = vpop.xlane.xlu0 %273
  %v275 = vsel %vm132, %v271, 0.0
  %276 = vadd.xlane.f32.xlu0 %v275
  %v277 = vpop.xlane.xlu0 %276
  %v278 = vrcp.pop %v274
  %v279 = vrcp.pop %v277
  %v280 = vmul.f32 %v269, %v278
  %v281 = vmul.f32 %v271, %v279
  %284 = vrot.lane.b32.xlu0 %v156, 120
  %v285 = vpop.permute.xlu0 %284
  %v288 = vsel %vm132, %v280, 0
  %v291 = vsel %vm132, %v281, 0
  %293 = vmatpush.msra.mxu0 0.0
  %294 = vmatpush.msra.mxu0 0.0
  %295 = vmatpush.msra.mxu0 0.0
  %296 = vmatpush.msra.mxu0 0.0
  %297 = vmatpush.msra.mxu0 0.0
  %298 = vmatpush.msra.mxu0 0.0
  %299 = vmatpush.msra.mxu0 0.0
  %300 = vmatpush.msra.mxu0 0.0
  %301 = vmatpush.msra.mxu0 0.0
  %302 = vmatpush.msra.mxu0 0.0
  %303 = vmatpush.msra.mxu0 0.0
  %304 = vmatpush.msra.mxu0 0.0
  %305 = vmatpush.msra.mxu0 0.0
  %306 = vmatpush.msra.mxu0 0.0
  %307 = vmatpush.msra.mxu0 %v222
  %308 = vmatpush.msra.mxu0 %v220
  %309 = vmatmul.f32.gmra.mxu0 %v288
  %v310 = vpop.f32.mrf.mxu0
  %v311 = vadd.f32 %v285, %v310
  %312 = vmatmul.f32.gmra.mxu0 %v291
  %v313 = vpop.f32.mrf.mxu0
  %v314 = vadd.f32 %v285, %v313
  %315 = vdwg.mxu0
  %vm316 = vcmp.gt.f32.partialorder %v311, 0.0
  %vm317 = vcmp.gt.f32.partialorder %v314, 0.0
  %v318 = vmul.f32 %v311, 1.442695
  %v319 = vpow.pop %v318
  %v320 = vmul.f32 %v314, 1.442695
  %v321 = vpow.pop %v320
  %v322 = vsub.f32 %v319, 1.0
  %v323 = vsub.f32 %v321, 1.0
  %v324 = vsel %vm316, %v311, %v322
  %v325 = vsel %vm317, %v314, %v323
  %v327 = vsel %vm48, %v324, 0
  %v330 = vsel %vm48, %v325, 0
  %332 = vmatpush.msra.mxu0 0.0
  %333 = vmatpush.msra.mxu0 0.0
  %334 = vmatpush.msra.mxu0 0.0
  %335 = vmatpush.msra.mxu0 0.0
  %336 = vmatpush.msra.mxu0 0.0
  %337 = vmatpush.msra.mxu0 0.0
  %338 = vmatpush.msra.mxu0 0.0
  %339 = vmatpush.msra.mxu0 0.0
  %340 = vmatpush.msra.mxu0 0.0
  %341 = vmatpush.msra.mxu0 0.0
  %342 = vmatpush.msra.mxu0 0.0
  %343 = vmatpush.msra.mxu0 0.0
  %344 = vmatpush.msra.mxu0 0.0
  %345 = vmatpush.msra.mxu0 0.0
  %346 = vmatpush.msra.mxu0 0.0
  %347 = vmatpush.msra.mxu0 %v82
  %348 = vmatmul.f32.gmra.mxu0 %v327
  %v349 = vpop.f32.mrf.mxu0
  %v350 = vadd.f32 0.0, %v349
  %351 = vmatmul.f32.gmra.mxu0 %v330
  %v352 = vpop.f32.mrf.mxu0
  %v353 = vadd.f32 0.0, %v352
  %354 = vdwg.mxu0
  %v356 = vsel %vm48, %v195, 0
  %v359 = vsel %vm48, %v196, 0
  %361 = vmatpush.msra.mxu0 0.0
  %362 = vmatpush.msra.mxu0 0.0
  %363 = vmatpush.msra.mxu0 0.0
  %364 = vmatpush.msra.mxu0 0.0
  %365 = vmatpush.msra.mxu0 0.0
  %366 = vmatpush.msra.mxu0 0.0
  %367 = vmatpush.msra.mxu0 0.0
  %368 = vmatpush.msra.mxu0 0.0
  %369 = vmatpush.msra.mxu0 0.0
  %370 = vmatpush.msra.mxu0 0.0
  %371 = vmatpush.msra.mxu0 0.0
  %372 = vmatpush.msra.mxu0 0.0
  %373 = vmatpush.msra.mxu0 0.0
  %374 = vmatpush.msra.mxu0 0.0
  %375 = vmatpush.msra.mxu0 0.0
  %376 = vmatpush.msra.mxu0 %v81
  %377 = vmatmul.f32.gmra.mxu0 %v356
  %v378 = vpop.f32.mrf.mxu0
  %v379 = vadd.f32 %v350, %v378
  %380 = vmatmul.f32.gmra.mxu0 %v359
  %v381 = vpop.f32.mrf.mxu0
  %v382 = vadd.f32 %v353, %v381
  %383 = vdwg.mxu0
  %v384 = vld [vmem:[%s7] sm:$0x1]
  %v385 = vld [vmem:[%s8] sm:$0x1]
  %v387 = vperm.slane %v385, 0
  %v389 = vmul.f32 %v379, %v387
  %v390 = vmul.f32 %v382, %v387
  %vm391 = vcmask 15360
  %v392 = vsel %vm391, %v389, 0.0
  %393 = vadd.xlane.f32.xlu0 %v392
  %v394 = vpop.xlane.xlu0 %393
  %v395 = vsel %vm391, %v390, 0.0
  %396 = vadd.xlane.f32.xlu0 %v395
  %v397 = vpop.xlane.xlu0 %396
  %v399 = vsel %vm391, %v384, 0
  %v402 = vsel %vm391, %v379, 0
  %v405 = vsel %vm391, %v382, 0
  %407 = vmatpush.xpose.msra.mxu0 0.0
  %408 = vmatpush.xpose.msra.mxu0 0.0
  %409 = vmatpush.xpose.msra.mxu0 0.0
  %410 = vmatpush.xpose.msra.mxu0 0.0
  %411 = vmatpush.xpose.msra.mxu0 0.0
  %412 = vmatpush.xpose.msra.mxu0 0.0
  %413 = vmatpush.xpose.msra.mxu0 0.0
  %414 = vmatpush.xpose.msra.mxu0 0.0
  %415 = vmatpush.xpose.msra.mxu0 0.0
  %416 = vmatpush.xpose.msra.mxu0 0.0
  %417 = vmatpush.xpose.msra.mxu0 0.0
  %418 = vmatpush.xpose.msra.mxu0 0.0
  %419 = vmatpush.xpose.msra.mxu0 0.0
  %420 = vmatpush.xpose.msra.mxu0 0.0
  %421 = vmatpush.xpose.msra.mxu0 %v405
  %422 = vmatpush.xpose.msra.mxu0 %v402
  %423 = vmatmul.f32.gmra.mxu0 %v399
  %v424 = vpop.f32.mrf.mxu0
  %v425 = vadd.f32 0.0, %v424
  %426 = vdwg.mxu0
  %v427 = vperm.slane %v425, 0
  %v428 = vadd.f32 %v394, %v427
  %v429 = vadd.f32 %v397, %v427
  %vm430 = vcmp.gt.f32.partialorder %v428, 0.0
  %vm431 = vcmp.gt.f32.partialorder %v429, 0.0
  %v432 = vmul.f32 %v428, 0.2
  %v433 = vmul.f32 %v429, 0.2
  %v434 = vsel %vm430, %v428, %v432
  %v435 = vsel %vm431, %v429, %v433
  %v436 = vadd.f32 %v434, %v43
  %v437 = vadd.f32 %v435, %v44
  %v438 = vsel %vm132, %v436, -inf
  %439 = vmax.xlane.f32.xlu0 %v438
  %v440 = vpop.xlane.xlu0 %439
  %v441 = vsel %vm132, %v437, -inf
  %442 = vmax.xlane.f32.xlu0 %v441
  %v443 = vpop.xlane.xlu0 %442
  %v444 = vsub.f32 %v436, %v440
  %v445 = vsub.f32 %v437, %v443
  %v446 = vmul.f32 %v444, 1.442695
  %v447 = vpow.pop %v446
  %v448 = vmul.f32 %v445, 1.442695
  %v449 = vpow.pop %v448
  %v450 = vsel %vm132, %v447, 0.0
  %451 = vadd.xlane.f32.xlu0 %v450
  %v452 = vpop.xlane.xlu0 %451
  %v453 = vsel %vm132, %v449, 0.0
  %454 = vadd.xlane.f32.xlu0 %v453
  %v455 = vpop.xlane.xlu0 %454
  %v456 = vrcp.pop %v452
  %v457 = vrcp.pop %v455
  %v458 = vmul.f32 %v447, %v456
  %v459 = vmul.f32 %v449, %v457
  %v460 = vld [vmem:[%s9] sm:$0x1]
  %v462 = vperm.slane %v460, 0
  %v465 = vsel %vm132, %v458, 0
  %v468 = vsel %vm132, %v459, 0
  %470 = vmatpush.msra.mxu0 0.0
  %471 = vmatpush.msra.mxu0 0.0
  %472 = vmatpush.msra.mxu0 0.0
  %473 = vmatpush.msra.mxu0 0.0
  %474 = vmatpush.msra.mxu0 0.0
  %475 = vmatpush.msra.mxu0 0.0
  %476 = vmatpush.msra.mxu0 0.0
  %477 = vmatpush.msra.mxu0 0.0
  %478 = vmatpush.msra.mxu0 0.0
  %479 = vmatpush.msra.mxu0 0.0
  %480 = vmatpush.msra.mxu0 0.0
  %481 = vmatpush.msra.mxu0 0.0
  %482 = vmatpush.msra.mxu0 0.0
  %483 = vmatpush.msra.mxu0 0.0
  %484 = vmatpush.msra.mxu0 %v382
  %485 = vmatpush.msra.mxu0 %v379
  %486 = vmatmul.f32.gmra.mxu0 %v465
  %v487 = vpop.f32.mrf.mxu0
  %v488 = vadd.f32 %v462, %v487
  %489 = vmatmul.f32.gmra.mxu0 %v468
  %v490 = vpop.f32.mrf.mxu0
  %v491 = vadd.f32 %v462, %v490
  %492 = vdwg.mxu0
  %vm493 = vcmp.gt.f32.partialorder %v488, 0.0
  %vm494 = vcmp.gt.f32.partialorder %v491, 0.0
  %v495 = vmul.f32 %v488, 1.442695
  %v496 = vpow.pop %v495
  %v497 = vmul.f32 %v491, 1.442695
  %v498 = vpow.pop %v497
  %v499 = vsub.f32 %v496, 1.0
  %v500 = vsub.f32 %v498, 1.0
  %v501 = vsel %vm493, %v488, %v499
  %v502 = vsel %vm494, %v491, %v500
  %v503 = vld [vmem:[%s10] sm:$0x3]
  %v504 = vld [vmem:[%s11] sm:$0x1]
  %v506 = vperm.slane %v504, 0
  %v509 = vsel %vm391, %v501, 0
  %v512 = vsel %vm391, %v502, 0
  %vm514 = vcmask 1041408
  %v516 = vsel %vm514, %v503, 0
  %518 = vmatpush.msra.mxu0 0.0
  %519 = vmatpush.msra.mxu0 0.0
  %520 = vmatpush.msra.mxu0 0.0
  %521 = vmatpush.msra.mxu0 0.0
  %522 = vmatpush.msra.mxu0 0.0
  %523 = vmatpush.msra.mxu0 0.0
  %524 = vmatpush.msra.mxu0 0.0
  %525 = vmatpush.msra.mxu0 0.0
  %526 = vmatpush.msra.mxu0 0.0
  %527 = vmatpush.msra.mxu0 0.0
  %528 = vmatpush.msra.mxu0 0.0
  %529 = vmatpush.msra.mxu0 0.0
  %530 = vmatpush.msra.mxu0 0.0
  %531 = vmatpush.msra.mxu0 0.0
  %532 = vmatpush.msra.mxu0 0.0
  %533 = vmatpush.msra.mxu0 %v516
  %534 = vmatmul.f32.gmra.mxu0 %v509
  %v535 = vpop.f32.mrf.mxu0
  %v536 = vadd.f32 %v506, %v535
  %537 = vmatmul.f32.gmra.mxu0 %v512
  %v538 = vpop.f32.mrf.mxu0
  %v539 = vadd.f32 %v506, %v538
  %540 = vdwg.mxu0
  %v541 = vsub.f32 0.0, %v536
  %v542 = vsub.f32 0.0, %v539
  %v543 = vmul.f32 %v541, 1.442695
  %v544 = vpow.pop %v543
  %v545 = vmul.f32 %v542, 1.442695
  %v546 = vpow.pop %v545
  %v547 = vadd.f32 %v544, 1.0
  %v548 = vadd.f32 %v546, 1.0
  %v549 = vrcp.pop %v547
  %v550 = vmul.f32 %v547, %v549
  %v551 = vsub.f32 1.0, %v550
  %v552 = vmul.f32 %v549, %v551
  %v553 = vadd.f32 %v549, %v552
  %vm554 = vweird.f32 %v547
  %vm555 = vweird.f32 %v549
  %vm556 = vmor %vm554, %vm555
  %v557 = vsel %vm556, %v549, %v553
  %v558 = vand.u32 2147483647, %v547
  %vm559 = vcmp.eq.f32.partialorder %v558, 8.507059e+37
  %v560 = vand.u32 %v547, 2147483648
  %v561 = vor.u32 1.1754944e-38, %v560
  %v562 = vsel %vm559, %v561, %v557
  %v563 = vmul.f32 1.0, %v562
  %v564 = vrcp.pop %v548
  %v565 = vmul.f32 %v548, %v564
  %v566 = vsub.f32 1.0, %v565
  %v567 = vmul.f32 %v564, %v566
  %v568 = vadd.f32 %v564, %v567
  %vm569 = vweird.f32 %v548
  %vm570 = vweird.f32 %v564
  %vm571 = vmor %vm569, %vm570
  %v572 = vsel %vm571, %v564, %v568
  %v573 = vand.u32 2147483647, %v548
  %vm574 = vcmp.eq.f32.partialorder %v573, 8.507059e+37
  %v575 = vand.u32 %v548, 2147483648
  %v576 = vor.u32 1.1754944e-38, %v575
  %v577 = vsel %vm574, %v576, %v572
  %v578 = vmul.f32 1.0, %v577
  %vm579 = vcmask 31744
  %580 = vst.msk [vmem:[%s12] sm:$0xff] %vm579, %v563
  %581 = vst.msk [vmem:[%s12 + $0x8] sm:$0xff] %vm579, %v578
  // Predicated region
  $region50: #{gat_forward.1} parent=0 // pred_check
    _
  $region51: #{gat_forward.1} parent=0 // pred_check_branch
    %583 = sbr.rel (0) target = $region53
  $region52: #{gat_forward.1} parent=0 // pred_region
    _
  $region53: #{gat_forward.1} parent=0 // pred_fallthru
    _
  // Predicated region
  $region54: #{gat_forward.1} parent=0 // pred_check
    _
  $region55: #{gat_forward.1} parent=0 // pred_check_branch
    %585 = sbr.rel (0) target = $region57
  $region56: #{gat_forward.1} parent=0 // pred_region
    _
  $region57: #{gat_forward.1} parent=0 // pred_fallthru
    _

</llo_original>
